<compile_context>
chip_gen: v7x
topology: tpu7x:2x2x1
jax: 0.10.0
libtpu: 0.0.40
codegen_flags: <defaults>
</compile_context>

<pallas_src>
import jax
import jax.numpy as jnp
from jax import lax
from jax.experimental import pallas as pl
from jax.experimental.pallas import tpu as pltpu

LN_EPS = 1e-5  # PyTorch nn.LayerNorm default


def _round_up(n, m):
    return ((n + m - 1) // m) * m


def cam_qkv_kernel(x_ref, y_ref, wq_ref, wkv_ref, bq_ref, bkv_ref,
                   q_ref, kv_ref):
    """One row tile: affine-free LayerNorm (fp32 stats) + two MXU dots."""

    def _normalize(t):
        t32 = t.astype(jnp.float32)
        mu = jnp.mean(t32, axis=-1, keepdims=True)
        c = t32 - mu
        var = jnp.mean(c * c, axis=-1, keepdims=True)
        return c * lax.rsqrt(var + LN_EPS)

    cdt = wq_ref.dtype                           # bf16 by default (MXU-native)
    xn = _normalize(x_ref[...]).astype(cdt)      # norm1(x), affine folded into W
    yn = _normalize(y_ref[...]).astype(cdt)      # norm1(y)

    q = jnp.dot(xn, wq_ref[...],
                preferred_element_type=jnp.float32) + bq_ref[...]
    kv = jnp.dot(yn, wkv_ref[...],
                 preferred_element_type=jnp.float32) + bkv_ref[...]

    q_ref[...] = q.astype(q_ref.dtype)
    kv_ref[...] = kv.astype(kv_ref.dtype)


def prepare_cam_qkv_params(ln_gamma, ln_beta, wq, wk, wv,
                           compute_dtype=jnp.bfloat16):
    """One-time parameter prep (call once, reuse across invocations).

    Pre-transposes the nn.Linear weights to (d_in, d_out), fuses Wk|Wv into a
    single (D, 2D) matrix, folds the LayerNorm affine into the weights
    (W' = diag(gamma) @ W^T, bias' = beta @ W^T) and casts to the MXU compute
    dtype.  Exact up to fp32 associativity.
    """
    D = wq.shape[0]
    g = ln_gamma.astype(jnp.float32).reshape(D, 1)
    b = ln_beta.astype(jnp.float32).reshape(1, D)

    wqT = wq.astype(jnp.float32).T                                   # (D, D)
    wkvT = jnp.concatenate([wk.astype(jnp.float32).T,
                            wv.astype(jnp.float32).T], axis=1)       # (D, 2D)

    wq_f = (g * wqT).astype(compute_dtype)
    wkv_f = (g * wkvT).astype(compute_dtype)
    bq = (b @ wqT).astype(jnp.float32)                               # (1, D)
    bkv = (b @ wkvT).astype(jnp.float32)                             # (1, 2D)
    return wq_f, wkv_f, bq, bkv


def cam_qkv(x, y, params, *, tm=256):
    """x, y: (B, N, dim); params from prepare_cam_qkv_params.
    Returns (q, k, v), each (B, N, dim) — same semantics as CAM.qkv(x, y)."""
    wq_f, wkv_f, bq, bkv = params
    B, N, D = x.shape
    M = B * N

    # Row tile: as large as requested, never larger than the (8-aligned) problem.
    tm_eff = min(_round_up(tm, 8), _round_up(M, 8))
    M_pad = _round_up(M, tm_eff)
    grid = (M_pad // tm_eff,)

    x2 = x.reshape(M, D)
    y2 = y.reshape(M, D)
    if M_pad != M:  # zero-pad tail rows; results for them are sliced off below
        pad = ((0, M_pad - M), (0, 0))
        x2 = jnp.pad(x2, pad)
        y2 = jnp.pad(y2, pad)

    row_spec = pl.BlockSpec((tm_eff, D), lambda i: (i, 0))
    kv_row_spec = pl.BlockSpec((tm_eff, 2 * D), lambda i: (i, 0))
    wq_spec = pl.BlockSpec((D, D), lambda i: (0, 0))
    wkv_spec = pl.BlockSpec((D, 2 * D), lambda i: (0, 0))
    bq_spec = pl.BlockSpec((1, D), lambda i: (0, 0))
    bkv_spec = pl.BlockSpec((1, 2 * D), lambda i: (0, 0))

    q2, kv2 = pl.pallas_call(
        cam_qkv_kernel,
        out_shape=(jax.ShapeDtypeStruct((M_pad, D), x.dtype),
                   jax.ShapeDtypeStruct((M_pad, 2 * D), x.dtype)),
        grid_spec=pltpu.PrefetchScalarGridSpec(
            num_scalar_prefetch=0,
            grid=grid,
            in_specs=[row_spec, row_spec, wq_spec, wkv_spec, bq_spec, bkv_spec],
            out_specs=[row_spec, kv_row_spec],
        ),
        compiler_params=pltpu.CompilerParams(
            dimension_semantics=("parallel",)),
    )(x2, y2, wq_f, wkv_f, bq, bkv)

    q = q2[:M].reshape(B, N, D)
    k = kv2[:M, :D].reshape(B, N, D)
    v = kv2[:M, D:].reshape(B, N, D)
    return q, k, v


def cam_qkv_ref(x, y, ln_gamma, ln_beta, wq, wk, wv):
    def ln(t):
        mu = jnp.mean(t, axis=-1, keepdims=True)
        var = jnp.mean((t - mu) ** 2, axis=-1, keepdims=True)
        return (t - mu) / jnp.sqrt(var + LN_EPS) * ln_gamma + ln_beta
    return (ln(x) @ wq.T, ln(y) @ wk.T, ln(y) @ wv.T)


if __name__ == "__main__":
    B, N, dim = 2, 8, 32

    key = jax.random.PRNGKey(0)
    kx, ky, kq, kk, kv_, kg, kb = jax.random.split(key, 7)

    x = jax.random.normal(kx, (B, N, dim), dtype=jnp.float32)
    y = jax.random.normal(ky, (B, N, dim), dtype=jnp.float32)

    # Parameters per CAM.__init__(dim=32, bias=False); non-trivial LN affine so
    # the gamma/beta -> weight folding is actually exercised.
    ln_gamma = 1.0 + 0.1 * jax.random.normal(kg, (dim,), jnp.float32)  # norm1.weight
    ln_beta = 0.1 * jax.random.normal(kb, (dim,), jnp.float32)         # norm1.bias
    wq = jax.random.normal(kq, (dim, dim), jnp.float32) * 0.05
    wk = jax.random.normal(kk, (dim, dim), jnp.float32) * 0.05
    wv = jax.random.normal(kv_, (dim, dim), jnp.float32) * 0.05
    # scale / proj / norm2 / mlp exist on the module but are untouched by qkv().

    qr, kr, vr = cam_qkv_ref(x, y, ln_gamma, ln_beta, wq, wk, wv)

    # --- default path: bf16 MXU operands, fp32 LN stats + accumulation ---
    params_bf16 = prepare_cam_qkv_params(ln_gamma, ln_beta, wq, wk, wv)
    q, k, v = cam_qkv(x, y, params_bf16)
    jax.block_until_ready((q, k, v))
    assert jnp.allclose(q, qr, atol=2e-2, rtol=2e-2)
    assert jnp.allclose(k, kr, atol=2e-2, rtol=2e-2)
    assert jnp.allclose(v, vr, atol=2e-2, rtol=2e-2)

    # --- fp32 path with ragged M (exercises padding + multi-step grid) ---
    B2, N2 = 3, 7  # M = 21 -> padded to 24, grid = (3,) with tm=8
    x_r = jax.random.normal(kx, (B2, N2, dim), dtype=jnp.float32)
    y_r = jax.random.normal(ky, (B2, N2, dim), dtype=jnp.float32)
    params_f32 = prepare_cam_qkv_params(ln_gamma, ln_beta, wq, wk, wv,
                                        compute_dtype=jnp.float32)
    q2, k2, v2 = cam_qkv(x_r, y_r, params_f32, tm=8)
    jax.block_until_ready((q2, k2, v2))
    qr2, kr2, vr2 = cam_qkv_ref(x_r, y_r, ln_gamma, ln_beta, wq, wk, wv)
    assert jnp.allclose(q2, qr2, atol=1e-4, rtol=1e-4)
    assert jnp.allclose(k2, kr2, atol=1e-4, rtol=1e-4)
    assert jnp.allclose(v2, vr2, atol=1e-4, rtol=1e-4)

    print("KERNEL_OK")
</pallas_src>

<mosaic_0001>
module attributes {stable_mosaic.version = 11 : i64} {
  func.func @cam_qkv_kernel(%arg0: i32, %arg1: memref<16x32xf32, #tpu.memory_space<vmem>>, %arg2: memref<16x32xf32, #tpu.memory_space<vmem>>, %arg3: memref<32x32xbf16, #tpu.memory_space<vmem>>, %arg4: memref<32x64xbf16, #tpu.memory_space<vmem>>, %arg5: memref<1x32xf32, #tpu.memory_space<vmem>>, %arg6: memref<1x64xf32, #tpu.memory_space<vmem>>, %arg7: memref<16x32xf32, #tpu.memory_space<vmem>>, %arg8: memref<16x64xf32, #tpu.memory_space<vmem>>) attributes {dimension_semantics = [#tpu.dimension_semantics<parallel>], iteration_bounds = array<i64: 1>, scalar_prefetch = 0 : i64, scratch_operands = 0 : i64, tpu.core_type = #tpu.core_type<tc>, window_params = [{transform_indices = @transform_0, window_bounds = array<i64: 16, 32>}, {transform_indices = @transform_1, window_bounds = array<i64: 16, 32>}, {pipeline_mode = #tpu.pipeline_mode<synchronous>, transform_indices = @transform_2, window_bounds = array<i64: 32, 32>}, {pipeline_mode = #tpu.pipeline_mode<synchronous>, transform_indices = @transform_3, window_bounds = array<i64: 32, 64>}, {pipeline_mode = #tpu.pipeline_mode<synchronous>, transform_indices = @transform_4, window_bounds = array<i64: 1, 32>}, {pipeline_mode = #tpu.pipeline_mode<synchronous>, transform_indices = @transform_5, window_bounds = array<i64: 1, 64>}, {transform_indices = @transform_6, window_bounds = array<i64: 16, 32>}, {transform_indices = @transform_7, window_bounds = array<i64: 16, 64>}]} {
    %c0 = arith.constant 0 : index
    %c0_0 = arith.constant 0 : index
    %0 = vector.load %arg1[%c0, %c0_0] : memref<16x32xf32, #tpu.memory_space<vmem>>, vector<16x32xf32>
    %cst = arith.constant dense<0.000000e+00> : vector<16xf32>
    %1 = vector.multi_reduction <add>, %0, %cst [1] : vector<16x32xf32> to vector<16xf32>
    %2 = vector.shape_cast %1 : vector<16xf32> to vector<16x1xf32>
    %cst_1 = arith.constant 3.200000e+01 : f32
    %3 = vector.broadcast %cst_1 : f32 to vector<16x1xf32>
    %4 = arith.divf %2, %3 : vector<16x1xf32>
    %5 = vector.broadcast %4 : vector<16x1xf32> to vector<16x32xf32>
    %6 = arith.subf %0, %5 : vector<16x32xf32>
    %7 = arith.mulf %6, %6 : vector<16x32xf32>
    %cst_2 = arith.constant dense<0.000000e+00> : vector<16xf32>
    %8 = vector.multi_reduction <add>, %7, %cst_2 [1] : vector<16x32xf32> to vector<16xf32>
    %9 = vector.shape_cast %8 : vector<16xf32> to vector<16x1xf32>
    %cst_3 = arith.constant 3.200000e+01 : f32
    %10 = vector.broadcast %cst_3 : f32 to vector<16x1xf32>
    %11 = arith.divf %9, %10 : vector<16x1xf32>
    %cst_4 = arith.constant 9.99999974E-6 : f32
    %12 = vector.broadcast %cst_4 : f32 to vector<16x1xf32>
    %13 = arith.addf %11, %12 : vector<16x1xf32>
    %14 = math.rsqrt %13 : vector<16x1xf32>
    %15 = vector.broadcast %14 : vector<16x1xf32> to vector<16x32xf32>
    %16 = arith.mulf %6, %15 : vector<16x32xf32>
    %17 = arith.truncf %16 : vector<16x32xf32> to vector<16x32xbf16>
    %c0_5 = arith.constant 0 : index
    %c0_6 = arith.constant 0 : index
    %18 = vector.load %arg2[%c0_5, %c0_6] : memref<16x32xf32, #tpu.memory_space<vmem>>, vector<16x32xf32>
    %cst_7 = arith.constant dense<0.000000e+00> : vector<16xf32>
    %19 = vector.multi_reduction <add>, %18, %cst_7 [1] : vector<16x32xf32> to vector<16xf32>
    %20 = vector.shape_cast %19 : vector<16xf32> to vector<16x1xf32>
    %cst_8 = arith.constant 3.200000e+01 : f32
    %21 = vector.broadcast %cst_8 : f32 to vector<16x1xf32>
    %22 = arith.divf %20, %21 : vector<16x1xf32>
    %23 = vector.broadcast %22 : vector<16x1xf32> to vector<16x32xf32>
    %24 = arith.subf %18, %23 : vector<16x32xf32>
    %25 = arith.mulf %24, %24 : vector<16x32xf32>
    %cst_9 = arith.constant dense<0.000000e+00> : vector<16xf32>
    %26 = vector.multi_reduction <add>, %25, %cst_9 [1] : vector<16x32xf32> to vector<16xf32>
    %27 = vector.shape_cast %26 : vector<16xf32> to vector<16x1xf32>
    %cst_10 = arith.constant 3.200000e+01 : f32
    %28 = vector.broadcast %cst_10 : f32 to vector<16x1xf32>
    %29 = arith.divf %27, %28 : vector<16x1xf32>
    %cst_11 = arith.constant 9.99999974E-6 : f32
    %30 = vector.broadcast %cst_11 : f32 to vector<16x1xf32>
    %31 = arith.addf %29, %30 : vector<16x1xf32>
    %32 = math.rsqrt %31 : vector<16x1xf32>
    %33 = vector.broadcast %32 : vector<16x1xf32> to vector<16x32xf32>
    %34 = arith.mulf %24, %33 : vector<16x32xf32>
    %35 = arith.truncf %34 : vector<16x32xf32> to vector<16x32xbf16>
    %c0_12 = arith.constant 0 : index
    %c0_13 = arith.constant 0 : index
    %36 = vector.load %arg3[%c0_12, %c0_13] : memref<32x32xbf16, #tpu.memory_space<vmem>>, vector<32x32xbf16>
    %cst_14 = arith.constant dense<0.000000e+00> : vector<16x32xf32>
    %37 = tpu.matmul %17, %36, %cst_14 {dimension_numbers = #tpu.dot_dimension_numbers<[1], [0], [0], [1], [0, 0, 1, 1], [], []>} : vector<16x32xbf16>, vector<32x32xbf16>, vector<16x32xf32> -> vector<16x32xf32>
    %c0_15 = arith.constant 0 : index
    %c0_16 = arith.constant 0 : index
    %38 = vector.load %arg5[%c0_15, %c0_16] : memref<1x32xf32, #tpu.memory_space<vmem>>, vector<1x32xf32>
    %39 = vector.broadcast %38 : vector<1x32xf32> to vector<16x32xf32>
    %40 = arith.addf %37, %39 : vector<16x32xf32>
    %c0_17 = arith.constant 0 : index
    %c0_18 = arith.constant 0 : index
    %41 = vector.load %arg4[%c0_17, %c0_18] : memref<32x64xbf16, #tpu.memory_space<vmem>>, vector<32x64xbf16>
    %cst_19 = arith.constant dense<0.000000e+00> : vector<16x64xf32>
    %42 = tpu.matmul %35, %41, %cst_19 {dimension_numbers = #tpu.dot_dimension_numbers<[1], [0], [0], [1], [0, 0, 1, 1], [], []>} : vector<16x32xbf16>, vector<32x64xbf16>, vector<16x64xf32> -> vector<16x64xf32>
    %c0_20 = arith.constant 0 : index
    %c0_21 = arith.constant 0 : index
    %43 = vector.load %arg6[%c0_20, %c0_21] : memref<1x64xf32, #tpu.memory_space<vmem>>, vector<1x64xf32>
    %44 = vector.broadcast %43 : vector<1x64xf32> to vector<16x64xf32>
    %45 = arith.addf %42, %44 : vector<16x64xf32>
    %c0_22 = arith.constant 0 : index
    %c0_23 = arith.constant 0 : index
    %46 = vector.load %arg7[%c0_22, %c0_23] : memref<16x32xf32, #tpu.memory_space<vmem>>, vector<16x32xf32>
    tpu.vector_store %arg7[%c0_22, %c0_23], %40 {strides = array<i32>} : memref<16x32xf32, #tpu.memory_space<vmem>>, vector<16x32xf32>,
    %c0_24 = arith.constant 0 : index
    %c0_25 = arith.constant 0 : index
    %47 = vector.load %arg8[%c0_24, %c0_25] : memref<16x64xf32, #tpu.memory_space<vmem>>, vector<16x64xf32>
    tpu.vector_store %arg8[%c0_24, %c0_25], %45 {strides = array<i32>} : memref<16x64xf32, #tpu.memory_space<vmem>>, vector<16x64xf32>,
    return
  }
  func.func @transform_0(%arg0: i32) -> (i32, i32) {
    %c0_i32 = arith.constant 0 : i32
    %c0_i32_0 = arith.constant 0 : i32
    return %arg0, %c0_i32 : i32, i32
  }
  func.func @transform_1(%arg0: i32) -> (i32, i32) {
    %c0_i32 = arith.constant 0 : i32
    %c0_i32_0 = arith.constant 0 : i32
    return %arg0, %c0_i32 : i32, i32
  }
  func.func @transform_2(%arg0: i32) -> (i32, i32) {
    %c0_i32 = arith.constant 0 : i32
    %c0_i32_0 = arith.constant 0 : i32
    %c0_i32_1 = arith.constant 0 : i32
    return %c0_i32, %c0_i32_0 : i32, i32
  }
  func.func @transform_3(%arg0: i32) -> (i32, i32) {
    %c0_i32 = arith.constant 0 : i32
    %c0_i32_0 = arith.constant 0 : i32
    %c0_i32_1 = arith.constant 0 : i32
    return %c0_i32, %c0_i32_0 : i32, i32
  }
  func.func @transform_4(%arg0: i32) -> (i32, i32) {
    %c0_i32 = arith.constant 0 : i32
    %c0_i32_0 = arith.constant 0 : i32
    %c0_i32_1 = arith.constant 0 : i32
    return %c0_i32, %c0_i32_0 : i32, i32
  }
  func.func @transform_5(%arg0: i32) -> (i32, i32) {
    %c0_i32 = arith.constant 0 : i32
    %c0_i32_0 = arith.constant 0 : i32
    %c0_i32_1 = arith.constant 0 : i32
    return %c0_i32, %c0_i32_0 : i32, i32
  }
  func.func @transform_6(%arg0: i32) -> (i32, i32) {
    %c0_i32 = arith.constant 0 : i32
    %c0_i32_0 = arith.constant 0 : i32
    return %arg0, %c0_i32 : i32, i32
  }
  func.func @transform_7(%arg0: i32) -> (i32, i32) {
    %c0_i32 = arith.constant 0 : i32
    %c0_i32_0 = arith.constant 0 : i32
    return %arg0, %c0_i32 : i32, i32
  }
}

</mosaic_0001>

<llo_original>
// kernel: tpu_custom_call.1
$region0: #{tpu_custom_call.1}
  #allocation0 [shape = 'u32[]', space=smem, size = 0x4, offset = 0x4, fixed_abs, tag = 'smem constant byte address 0x4 - core index']
  #allocation1 [shape = 'u32[144,128]{1,0:T(1,128)}', space=vmem, size = 0x12000, scoped, tag = 'internal scratch']
  %s0 = inlined_call_operand.hbm [shape: f32[16,32], index: 0, kind: input, shape index: {}]
  %s1 = inlined_call_operand.hbm [shape: f32[16,32], index: 1, kind: input, shape index: {}]
  %s2 = inlined_call_operand.hbm [shape: bf16[32,32], index: 2, kind: input, shape index: {}]
  %s3 = inlined_call_operand.hbm [shape: bf16[32,64], index: 3, kind: input, shape index: {}]
  %s4 = inlined_call_operand.vmem [shape: f32[1,32], index: 4, kind: input, shape index: {}]
  %s5 = inlined_call_operand.vmem [shape: f32[1,64], index: 5, kind: input, shape index: {}]
  %s6 = inlined_call_operand.hbm [shape: f32[16,32], index: 6, kind: output, shape index: {0}]
  %s7 = inlined_call_operand.hbm [shape: f32[16,64], index: 7, kind: output, shape index: {1}]
  %8 = xla_tuple %s6, %s7
  %s9 = sld [smem:[#allocation0]]
  $region58: #{tpu_custom_call.1} parent=0
    _
  %s11 = ssub.s32 1, %s9
  %s12 = scalar_select 0, %s11, %s9
  $region1: #{tpu_custom_call.1} parent=0
    #allocation2 [shape = 'u8[8192]{0}', space=vmem, size = 0x2000, scoped, tag = 'input window, operand 0, single buffered']
    #allocation3 [shape = 's32[1]{0}', space=sflag, size = 0x4, scoped, tag = 'scoped memory for tpu_custom_call.1']
    #allocation4 [shape = 's32[1]{0}', space=sflag, size = 0x4, scoped, tag = 'scoped memory for tpu_custom_call.1']
    #allocation5 [shape = 'u8[8192]{0}', space=vmem, size = 0x2000, scoped, tag = 'input window, operand 1, single buffered']
    #allocation6 [shape = 's32[1]{0}', space=sflag, size = 0x4, scoped, tag = 'scoped memory for tpu_custom_call.1']
    #allocation7 [shape = 'u8[8192]{0}', space=vmem, size = 0x2000, scoped, tag = 'input window, operand 2, single buffered']
    #allocation8 [shape = 'u8[8192]{0}', space=vmem, size = 0x2000, scoped, tag = 'input window, operand 3, single buffered']
    #allocation9 [shape = 's32[1]{0}', space=sflag, size = 0x4, scoped, tag = 'scoped memory for tpu_custom_call.1']
    #allocation10 [shape = 'u8[8192]{0}', space=vmem, size = 0x2000, scoped, tag = 'output window, operand 0, single buffered']
    #allocation11 [shape = 'u8[8192]{0}', space=vmem, size = 0x2000, scoped, tag = 'output window, operand 1, single buffered']
    #allocation12 [shape = 's32[1]{0}', space=sflag, size = 0x4, scoped, tag = 'scoped memory for tpu_custom_call.1']
    %13 = vsyncpa [#allocation3], 0
    %14 = vsyncpa [#allocation6], 0
    %15 = vsyncpa [#allocation9], 0
    %16 = vsyncpa [#allocation4], 0
    %17 = vsyncpa [#allocation12], 0
    // Predicated region
    $region2: #{tpu_custom_call.1} parent=1 // pred_check
      _
    $region3: #{tpu_custom_call.1} parent=1 // pred_check_branch
      %19 = sbr.rel (0) target = $region5
    $region4: #{tpu_custom_call.1} parent=1 // pred_region
      %s21 = ssub.s32 256, 256
      %22 = vsyncadd [#allocation3], %s21
      %s23 = sshll.u32 [#allocation2], 4
      %s24 = int_to_ptr.vmem [resolvable:$true] %s23
      %29 = dma.hbm_to_vmem [thread:$0]  %s0, 256, %s24, [#allocation3], 128, 128, 8
    $region5: #{tpu_custom_call.1} parent=1 // pred_fallthru
      _
    // Predicated region
    $region6: #{tpu_custom_call.1} parent=1 // pred_check
      _
    $region7: #{tpu_custom_call.1} parent=1 // pred_check_branch
      %31 = sbr.rel (0) target = $region9
    $region8: #{tpu_custom_call.1} parent=1 // pred_region
      %s33 = ssub.s32 256, 256
      %34 = vsyncadd [#allocation6], %s33
      %s35 = sshll.u32 [#allocation5], 4
      %s36 = int_to_ptr.vmem [resolvable:$true] %s35
      %41 = dma.hbm_to_vmem [thread:$0]  %s1, 256, %s36, [#allocation6], 128, 128, 8
    $region9: #{tpu_custom_call.1} parent=1 // pred_fallthru
      _
    // Predicated region
    $region10: #{tpu_custom_call.1} parent=1 // pred_check
      _
    $region11: #{tpu_custom_call.1} parent=1 // pred_check_branch
      %43 = sbr.rel (0) target = $region13
    $region12: #{tpu_custom_call.1} parent=1 // pred_region
      %s45 = ssub.s32 256, 256
      %46 = vsyncadd [#allocation6], %s45
      %s47 = sshll.u32 [#allocation7], 4
      %s48 = int_to_ptr.vmem [resolvable:$true] %s47
      %53 = dma.hbm_to_vmem [thread:$0]  %s2, 256, %s48, [#allocation6], 64, 64, 4
    $region13: #{tpu_custom_call.1} parent=1 // pred_fallthru
      _
    // Predicated region
    $region14: #{tpu_custom_call.1} parent=1 // pred_check
      _
    $region15: #{tpu_custom_call.1} parent=1 // pred_check_branch
      %55 = sbr.rel (0) target = $region17
    $region16: #{tpu_custom_call.1} parent=1 // pred_region
      %s57 = ssub.s32 256, 256
      %58 = vsyncadd [#allocation9], %s57
      %s59 = sshll.u32 [#allocation8], 4
      %s60 = int_to_ptr.vmem [resolvable:$true] %s59
      %65 = dma.hbm_to_vmem [thread:$0]  %s3, 256, %s60, [#allocation9], 64, 64, 4
    $region17: #{tpu_custom_call.1} parent=1 // pred_fallthru
      _
    // Predicated region
    $region18: #{tpu_custom_call.1} parent=1 // pred_check
      _
    $region19: #{tpu_custom_call.1} parent=1 // pred_check_branch
      %67 = sbr.rel (0) target = $region21
    $region20: #{tpu_custom_call.1} parent=1 // pred_region
      _
    $region21: #{tpu_custom_call.1} parent=1 // pred_fallthru
      _
    // Predicated region
    $region22: #{tpu_custom_call.1} parent=1 // pred_check
      _
    $region23: #{tpu_custom_call.1} parent=1 // pred_check_branch
      %69 = sbr.rel (0) target = $region25
    $region24: #{tpu_custom_call.1} parent=1 // pred_region
      _
    $region25: #{tpu_custom_call.1} parent=1 // pred_fallthru
      _
    // Predicated region
    $region26: #{tpu_custom_call.1} parent=1 // pred_check
      _
    $region27: #{tpu_custom_call.1} parent=1 // pred_check_branch
      %71 = sbr.rel (0) target = $region29
    $region28: #{tpu_custom_call.1} parent=1 // pred_region
      %72 = dma.done [#allocation3], 256
    $region29: #{tpu_custom_call.1} parent=1 // pred_fallthru
      _
    // Predicated region
    $region30: #{tpu_custom_call.1} parent=1 // pred_check
      _
    $region31: #{tpu_custom_call.1} parent=1 // pred_check_branch
      %74 = sbr.rel (0) target = $region33
    $region32: #{tpu_custom_call.1} parent=1 // pred_region
      %75 = dma.done [#allocation6], 256
    $region33: #{tpu_custom_call.1} parent=1 // pred_fallthru
      _
    // Predicated region
    $region34: #{tpu_custom_call.1} parent=1 // pred_check
      _
    $region35: #{tpu_custom_call.1} parent=1 // pred_check_branch
      %77 = sbr.rel (0) target = $region37
    $region36: #{tpu_custom_call.1} parent=1 // pred_region
      %78 = dma.done [#allocation6], 256
    $region37: #{tpu_custom_call.1} parent=1 // pred_fallthru
      _
    // Predicated region
    $region38: #{tpu_custom_call.1} parent=1 // pred_check
      _
    $region39: #{tpu_custom_call.1} parent=1 // pred_check_branch
      %80 = sbr.rel (0) target = $region41
    $region40: #{tpu_custom_call.1} parent=1 // pred_region
      %81 = dma.done [#allocation9], 256
    $region41: #{tpu_custom_call.1} parent=1 // pred_fallthru
      _
    %v83 = vld [vmem:[#allocation2] sm:$0xff]
    %v84 = vld [vmem:[#allocation2 + $0x8] sm:$0xff]
    %vm85 = vcmask 261120
    %v86 = vsel %vm85, %v83, 0.0
    %87 = vadd.xlane.f32.xlu0 %v86
    %v88 = vpop.xlane.xlu0 %87
    %v89 = vsel %vm85, %v84, 0.0
    %90 = vadd.xlane.f32.xlu0 %v89
    %v91 = vpop.xlane.xlu0 %90
    %v92 = vrcp.pop 32.0
    %v93 = vmul.f32 %v88, %v92
    %v94 = vmul.f32 %v91, %v92
    %v95 = vsub.f32 %v83, %v93
    %v96 = vsub.f32 %v84, %v94
    %v97 = vmul.f32 %v95, %v95
    %v98 = vmul.f32 %v96, %v96
    %v99 = vsel %vm85, %v97, 0.0
    %100 = vadd.xlane.f32.xlu0 %v99
    %v101 = vpop.xlane.xlu0 %100
    %v102 = vsel %vm85, %v98, 0.0
    %103 = vadd.xlane.f32.xlu0 %v102
    %v104 = vpop.xlane.xlu0 %103
    %v105 = vmul.f32 %v101, %v92
    %v106 = vmul.f32 %v104, %v92
    %v107 = vadd.f32 %v105, 1e-05
    %v108 = vadd.f32 %v106, 1e-05
    %v109 = vrsqrt.pop %v107
    %v110 = vrsqrt.pop %v108
    %v111 = vmul.f32 %v95, %v109
    %v112 = vmul.f32 %v96, %v110
    %v113 = vpack.c.bf16 %v112, %v111
    %v114 = vld [vmem:[#allocation5] sm:$0xff]
    %v115 = vld [vmem:[#allocation5 + $0x8] sm:$0xff]
    %v116 = vsel %vm85, %v114, 0.0
    %117 = vadd.xlane.f32.xlu0 %v116
    %v118 = vpop.xlane.xlu0 %117
    %v119 = vsel %vm85, %v115, 0.0
    %120 = vadd.xlane.f32.xlu0 %v119
    %v121 = vpop.xlane.xlu0 %120
    %v122 = vmul.f32 %v118, %v92
    %v123 = vmul.f32 %v121, %v92
    %v124 = vsub.f32 %v114, %v122
    %v125 = vsub.f32 %v115, %v123
    %v126 = vmul.f32 %v124, %v124
    %v127 = vmul.f32 %v125, %v125
    %v128 = vsel %vm85, %v126, 0.0
    %129 = vadd.xlane.f32.xlu0 %v128
    %v130 = vpop.xlane.xlu0 %129
    %v131 = vsel %vm85, %v127, 0.0
    %132 = vadd.xlane.f32.xlu0 %v131
    %v133 = vpop.xlane.xlu0 %132
    %v134 = vmul.f32 %v130, %v92
    %v135 = vmul.f32 %v133, %v92
    %v136 = vadd.f32 %v134, 1e-05
    %v137 = vadd.f32 %v135, 1e-05
    %v138 = vrsqrt.pop %v136
    %v139 = vrsqrt.pop %v137
    %v140 = vmul.f32 %v124, %v138
    %v141 = vmul.f32 %v125, %v139
    %v142 = vpack.c.bf16 %v141, %v140
    %v143 = vld [vmem:[#allocation7] sm:$0xf]
    %v144 = vld [vmem:[#allocation7 + $0x4] sm:$0xf]
    %v145 = vld [vmem:[#allocation7 + $0x8] sm:$0xf]
    %v146 = vld [vmem:[#allocation7 + $0xc] sm:$0xf]
    %v147 = vld [vmem:[%s4] sm:$0x1]
    %v149 = vlaneseq
    %v150 = vshrl.u32 %v149, 7
    %v151 = vsub.s32 0, %v150
    %v152 = vrot.slane %v147, %v151
    %v158 = vunpack.c.l.b16 %v143
    %v159 = vunpack.c.l.b16 %v144
    %v160 = vunpack.c.l.b16 %v145
    %v161 = vunpack.c.l.b16 %v146
    %v162 = vpack.c.b16 %v159, %v158
    %v163 = vpack.c.b16 %v161, %v160
    %v167 = vsel %vm85, %v113, 0
    %169 = vmatprep.subr.bf16.mxu0 0
    %170 = vmatpush1.bf16.msra.mxu0 %v162
    %171 = vmatprep.subr.bf16.mxu0 0
    %172 = vmatpush1.bf16.msra.mxu0 %v163
    %173 = vmatprep.subr.bf16.mxu0 0
    %174 = vmatpush1.bf16.msra.mxu0 0
    %175 = vmatprep.subr.bf16.mxu0 0
    %176 = vmatpush1.bf16.msra.mxu0 0
    %177 = vmatprep.subr.bf16.mxu0 0
    %178 = vmatpush1.bf16.msra.mxu0 0
    %179 = vmatprep.subr.bf16.mxu0 0
    %180 = vmatpush1.bf16.msra.mxu0 0
    %181 = vmatprep.subr.bf16.mxu0 0
    %182 = vmatpush1.bf16.msra.mxu0 0
    %183 = vmatprep.subr.bf16.mxu0 0
    %184 = vmatpush1.bf16.msra.mxu0 0
    %185 = vmatprep.subr.bf16.mxu0 0
    %186 = vmatpush1.bf16.msra.mxu0 0
    %187 = vmatprep.subr.bf16.mxu0 0
    %188 = vmatpush1.bf16.msra.mxu0 0
    %189 = vmatprep.subr.bf16.mxu0 0
    %190 = vmatpush1.bf16.msra.mxu0 0
    %191 = vmatprep.subr.bf16.mxu0 0
    %192 = vmatpush1.bf16.msra.mxu0 0
    %193 = vmatprep.subr.bf16.mxu0 0
    %194 = vmatpush1.bf16.msra.mxu0 0
    %195 = vmatprep.subr.bf16.mxu0 0
    %196 = vmatpush1.bf16.msra.mxu0 0
    %197 = vmatprep.subr.bf16.mxu0 0
    %198 = vmatpush1.bf16.msra.mxu0 0
    %199 = vmatprep.subr.bf16.mxu0 0
    %200 = vmatpush1.bf16.msra.mxu0 0
    %201 = vmatprep.mubr.bf16.mxu0 0
    %202 = vmatmul.mubr.bf16.gmra.mrb[0].mxu0 %v167
    %v203 = vpop.f32.mrb[0].mxu0
    %v204 = vadd.f32 %v152, %v203
    %v205 = vpop.f32.mrb[0].mxu0
    %v206 = vpop.f32.mrb[0].mxu0
    %v207 = vadd.f32 %v152, %v206
    %v208 = vpop.f32.mrb[0].mxu0
    %209 = vdwg.mxu0
    %v210 = vld [vmem:[#allocation8] sm:$0xf]
    %v211 = vld [vmem:[#allocation8 + $0x4] sm:$0xf]
    %v212 = vld [vmem:[#allocation8 + $0x8] sm:$0xf]
    %v213 = vld [vmem:[#allocation8 + $0xc] sm:$0xf]
    %v214 = vld [vmem:[%s5] sm:$0x1]
    %v216 = vlaneseq
    %v217 = vshrl.u32 %v216, 7
    %v218 = vsub.s32 0, %v217
    %v219 = vrot.slane %v214, %v218
    %v225 = vunpack.c.l.b16 %v210
    %v226 = vunpack.c.l.b16 %v211
    %v227 = vunpack.c.l.b16 %v212
    %v228 = vunpack.c.l.b16 %v213
    %v229 = vpack.c.b16 %v226, %v225
    %v230 = vpack.c.b16 %v228, %v227
    %v234 = vsel %vm85, %v142, 0
    %236 = vmatprep.subr.bf16.mxu0 0
    %237 = vmatpush1.bf16.msra.mxu0 %v229
    %238 = vmatprep.subr.bf16.mxu0 0
    %239 = vmatpush1.bf16.msra.mxu0 %v230
    %240 = vmatprep.subr.bf16.mxu0 0
    %241 = vmatpush1.bf16.msra.mxu0 0
    %242 = vmatprep.subr.bf16.mxu0 0
    %243 = vmatpush1.bf16.msra.mxu0 0
    %244 = vmatprep.subr.bf16.mxu0 0
    %245 = vmatpush1.bf16.msra.mxu0 0
    %246 = vmatprep.subr.bf16.mxu0 0
    %247 = vmatpush1.bf16.msra.mxu0 0
    %248 = vmatprep.subr.bf16.mxu0 0
    %249 = vmatpush1.bf16.msra.mxu0 0
    %250 = vmatprep.subr.bf16.mxu0 0
    %251 = vmatpush1.bf16.msra.mxu0 0
    %252 = vmatprep.subr.bf16.mxu0 0
    %253 = vmatpush1.bf16.msra.mxu0 0
    %254 = vmatprep.subr.bf16.mxu0 0
    %255 = vmatpush1.bf16.msra.mxu0 0
    %256 = vmatprep.subr.bf16.mxu0 0
    %257 = vmatpush1.bf16.msra.mxu0 0
    %258 = vmatprep.subr.bf16.mxu0 0
    %259 = vmatpush1.bf16.msra.mxu0 0
    %260 = vmatprep.subr.bf16.mxu0 0
    %261 = vmatpush1.bf16.msra.mxu0 0
    %262 = vmatprep.subr.bf16.mxu0 0
    %263 = vmatpush1.bf16.msra.mxu0 0
    %264 = vmatprep.subr.bf16.mxu0 0
    %265 = vmatpush1.bf16.msra.mxu0 0
    %266 = vmatprep.subr.bf16.mxu0 0
    %267 = vmatpush1.bf16.msra.mxu0 0
    %268 = vmatprep.mubr.bf16.mxu0 0
    %269 = vmatmul.mubr.bf16.gmra.mrb[0].mxu0 %v234
    %v270 = vpop.f32.mrb[0].mxu0
    %v271 = vadd.f32 %v219, %v270
    %v272 = vpop.f32.mrb[0].mxu0
    %v273 = vpop.f32.mrb[0].mxu0
    %v274 = vadd.f32 %v219, %v273
    %v275 = vpop.f32.mrb[0].mxu0
    %276 = vdwg.mxu0
    %277 = vst.msk [vmem:[#allocation10] sm:$0xff] %vm85, %v204
    %278 = vst.msk [vmem:[#allocation10 + $0x8] sm:$0xff] %vm85, %v207
    %vm279 = vcmask 523264
    %280 = vst.msk [vmem:[#allocation11] sm:$0xff] %vm279, %v271
    %281 = vst.msk [vmem:[#allocation11 + $0x8] sm:$0xff] %vm279, %v274
    // Predicated region
    $region42: #{tpu_custom_call.1} parent=1 // pred_check
      _
    $region43: #{tpu_custom_call.1} parent=1 // pred_check_branch
      %283 = sbr.rel (0) target = $region45
    $region44: #{tpu_custom_call.1} parent=1 // pred_region
      %s285 = ssub.s32 256, 256
      %286 = vsyncadd [#allocation4], %s285
      %s287 = sshll.u32 [#allocation10], 4
      %s288 = int_to_ptr.vmem [resolvable:$true] %s287
      %293 = dma.vmem_to_hbm [thread:$0]  %s288, 256, %s6, [#allocation4], 128, 128, 8
    $region45: #{tpu_custom_call.1} parent=1 // pred_fallthru
      _
    // Predicated region
    $region46: #{tpu_custom_call.1} parent=1 // pred_check
      _
    $region47: #{tpu_custom_call.1} parent=1 // pred_check_branch
      %295 = sbr.rel (0) target = $region49
    $region48: #{tpu_custom_call.1} parent=1 // pred_region
      %s297 = ssub.s32 256, 256
      %298 = vsyncadd [#allocation12], %s297
      %s299 = sshll.u32 [#allocation11], 4
      %s300 = int_to_ptr.vmem [resolvable:$true] %s299
      %305 = dma.vmem_to_hbm [thread:$0]  %s300, 256, %s7, [#allocation12], 128, 128, 8
    $region49: #{tpu_custom_call.1} parent=1 // pred_fallthru
      _
    // Predicated region
    $region50: #{tpu_custom_call.1} parent=1 // pred_check
      _
    $region51: #{tpu_custom_call.1} parent=1 // pred_check_branch
      %307 = sbr.rel (0) target = $region53
    $region52: #{tpu_custom_call.1} parent=1 // pred_region
      %308 = dma.done [#allocation4], 256
    $region53: #{tpu_custom_call.1} parent=1 // pred_fallthru
      _
    // Predicated region
    $region54: #{tpu_custom_call.1} parent=1 // pred_check
      _
    $region55: #{tpu_custom_call.1} parent=1 // pred_check_branch
      %310 = sbr.rel (0) target = $region57
    $region56: #{tpu_custom_call.1} parent=1 // pred_region
      %311 = dma.done [#allocation12], 256
    $region57: #{tpu_custom_call.1} parent=1 // pred_fallthru
      _
    %312 = vsyncpa [#allocation3], 1
    %313 = vsyncpa [#allocation6], 1
    %314 = vsyncpa [#allocation9], 1
    %315 = vsyncpa [#allocation4], 1
    %316 = vsyncpa [#allocation12], 1

</llo_original>
